<compile_context>
chip_gen: v7x
topology: tpu7x:2x2x1
jax: 0.10.0
libtpu: 0.0.40
codegen_flags: <defaults>
</compile_context>

<pallas_src>
import jax
import jax.numpy as jnp
from jax import lax
from jax.experimental import pallas as pl
from jax.experimental.pallas import tpu as pltpu

LRELU_SLOPE = 0.2


def _leaky(x):
    # 2 VPU ops (mul + max) instead of compare + select + mul.
    return jnp.maximum(x, LRELU_SLOPE * x)


def _make_subspace_kernel(NB, H, W, Cin, Cout):
    """Fused Subspace kernel for NB images packed along the row dimension."""
    WCi, WCo = W * Cin, W * Cout
    S = H + 4                 # per-image row stride in the zero-bordered slab
    G = NB * S                # slab rows handled per grid step
    M1 = G - 2                # rows produced by the conv_1 tap matmuls
    M2 = G - 4                # rows produced by the conv_2 tap matmuls

    def kernel(x_ref, w1_ref, w2_ref, b_ref, o_ref):
        # x_ref:  (G, W*Cin)            f32   NB images, 2-row zero border each
        # w1_ref: (3, W*Cin, 2*W*Cout)  bf16  conv_1 row-taps + merged 1x1 cols
        # w2_ref: (3, W*Cout, W*Cout)   bf16  conv_2 row-taps
        # b_ref:  (3, W*Cout)           f32   [b1, b2, b_id + b_sc] lane-tiled
        # o_ref:  (G, W*Cout)           f32   rows [0, M2) valid, seams discarded
        xp = x_ref[...]
        b = b_ref[...]

        # conv_1 (3x3) + merged identity/shortcut 1x1: three row-tap matmuls.
        # Tap kh multiplies slab row (center + kh - 1); r1[j] is the conv
        # centered at slab row j+1.
        r1 = None
        for kh in range(3):
            lhs = xp[kh:kh + M1, :].astype(jnp.bfloat16)
            t = jnp.dot(lhs, w1_ref[kh], preferred_element_type=jnp.float32)
            r1 = t if r1 is None else r1 + t
        y1 = _leaky(r1[:, :WCo] + b[0:1, :])        # relu_1(conv_1(x) + b1)
        sc_id = r1[:, WCo:] + b[2:3, :]             # identity(x) + shortcut(x)

        # Zero the seam rows (image borders) so conv_2 sees its zero padding;
        # y1 stays in vregs -- no scratch round trip, no scratch zeroing.
        j = lax.broadcasted_iota(jnp.int32, (M1, 1), 0) % S
        y1m = jnp.where((j >= 1) & (j <= H), y1, 0.0)

        # conv_2 (3x3) over the activated intermediate; r2[u] is centered at
        # slab row u+2.
        r2 = None
        for kh in range(3):
            lhs = y1m[kh:kh + M2, :].astype(jnp.bfloat16)
            t = jnp.dot(lhs, w2_ref[kh], preferred_element_type=jnp.float32)
            r2 = t if r2 is None else r2 + t

        out = _leaky(r2 + b[1:2, :]) + sc_id[1:1 + M2, :]
        o_ref[0:M2, :] = out.astype(o_ref.dtype)    # lane-dense (M2, W*Cout) store

    return kernel


def subspace_forward(x, params):
    """x: (N, H, W, Cin) NHWC float32. Returns (N, H, W, Cout)."""
    w1, b1, w2, b2, wid, bid, wsc, bsc = params
    N, H, W, Cin = x.shape
    Cout = w1.shape[-1]
    WCi, WCo = W * Cin, W * Cout
    S = H + 4

    # Images packed per grid step: biggest divisor of N whose packed block stays
    # around MXU-friendly ~512 rows and keeps the row dim legal for BlockSpec.
    NB = N
    for d in range(N, 0, -1):
        if N % d == 0 and d * S <= 512 and (d == N or (d * S) % 8 == 0):
            NB = d
            break
    G = NB * S

    # ---- weight prep (tiny, fuses into the surrounding jit) -----------------
    # Block-Toeplitz expansion along W: band[q, a, b] = 1 iff a == b + q - 1,
    # which also realizes the zero padding at the W boundaries.
    q = jnp.arange(3).reshape(3, 1, 1)
    a = jnp.arange(W).reshape(1, W, 1)
    b_ = jnp.arange(W).reshape(1, 1, W)
    band = (a == b_ + q - 1).astype(x.dtype)                        # (3, W, W)

    w1_toep = jnp.einsum("qab,hqio->haibo", band, w1).reshape(3, WCi, WCo)
    w2_toep = jnp.einsum("qab,hqio->haibo", band, w2).reshape(3, WCo, WCo)

    # identity + shortcut 1x1 merged (same accumulator in the reference) and
    # folded into conv_1's matmul as extra output columns (center tap only).
    wsum = wid + wsc
    sc_blk = jnp.einsum("ab,io->aibo", jnp.eye(W, dtype=x.dtype),
                        wsum).reshape(WCi, WCo)
    w1_big = jnp.concatenate(
        [w1_toep,
         jnp.stack([jnp.zeros_like(sc_blk), sc_blk, jnp.zeros_like(sc_blk)])],
        axis=-1).astype(jnp.bfloat16)                               # (3, WCi, 2*WCo)
    w2_toep = w2_toep.astype(jnp.bfloat16)

    biases = jnp.concatenate([jnp.tile(b1, (1, W)),
                              jnp.tile(b2, (1, W)),
                              jnp.tile(bid + bsc, (1, W))], axis=0)  # (3, WCo) f32

    # Pack the batch along rows with a 2-row zero border per image (row halo).
    xp = jnp.pad(x.reshape(N, H, WCi), ((0, 0), (2, 2), (0, 0))).reshape(N * S, WCi)

    # TODO(synk): at realistic HINet sizes (e.g. 256x256x64) drop the full-W
    # block-Toeplitz folding (W-tile / im2col so K ~ 3*Cin), H-tile the grid
    # with the halo DMA'd straight from HBM (memory_space=pl.ANY +
    # make_async_copy), keep two parallel grid axes (batch x H-tiles) for
    # v7x's two TensorCores, and raise vmem_limit_bytes for the bigger blocks.
    kernel = _make_subspace_kernel(NB, H, W, Cin, Cout)
    out = pl.pallas_call(
        kernel,
        out_shape=jax.ShapeDtypeStruct((N * S, WCo), jnp.float32),
        grid_spec=pltpu.PrefetchScalarGridSpec(
            num_scalar_prefetch=0,
            grid=(N // NB,),
            in_specs=[
                pl.BlockSpec((G, WCi), lambda s: (s, 0)),
                pl.BlockSpec((3, WCi, 2 * WCo), lambda s: (0, 0, 0)),
                pl.BlockSpec((3, WCo, WCo), lambda s: (0, 0, 0)),
                pl.BlockSpec((3, WCo), lambda s: (0, 0)),
            ],
            out_specs=pl.BlockSpec((G, WCo), lambda s: (s, 0)),
        ),
        compiler_params=pltpu.CompilerParams(
            dimension_semantics=("parallel",)),
    )(xp, w1_big, w2_toep, biases)

    # Valid rows are the first H of each image's (H+4)-row span.
    return out.reshape(N, S, W, Cout)[:, :H]


def subspace_reference(x, params):
    """Pure-JAX reference (NHWC, f32 weights) for correctness check."""
    w1, b1, w2, b2, wid, bid, wsc, bsc = params
    dn = ("NHWC", "HWIO", "NHWC")

    def conv3(v, w, b):
        y = lax.conv_general_dilated(v, w, (1, 1), "SAME", dimension_numbers=dn)
        return y + b.reshape(1, 1, 1, -1)

    def conv1(v, w, b):
        y = lax.conv_general_dilated(v, w.reshape(1, 1, *w.shape), (1, 1),
                                     "SAME", dimension_numbers=dn)
        return y + b.reshape(1, 1, 1, -1)

    sc = conv1(x, wsc, bsc)
    y = _leaky(conv3(x, w1, b1))
    y = _leaky(conv3(y, w2, b2))
    y = y + conv1(x, wid, bid)
    return y + sc


if __name__ == "__main__":
    key = jax.random.PRNGKey(0)
    N, Cin, H, W = 2, 4, 16, 16     # small shapes consistent with the module
    Cout = 8
    ks = jax.random.split(key, 9)

    def winit(k, shape, fan_in):
        return jax.random.normal(k, shape, jnp.float32) / jnp.sqrt(float(fan_in))

    # Deterministic synthetic parameters (shapes from the nn.Conv2d definitions),
    # stored HWIO / (Cin, Cout) for the NHWC kernels.
    w1 = winit(ks[1], (3, 3, Cin, Cout), 9 * Cin)     # conv_1
    b1 = winit(ks[2], (1, Cout), 9 * Cin)
    w2 = winit(ks[3], (3, 3, Cout, Cout), 9 * Cout)   # conv_2
    b2 = winit(ks[4], (1, Cout), 9 * Cout)
    wid = winit(ks[5], (Cin, Cout), Cin)              # identity 1x1 (bias=True)
    bid = winit(ks[6], (1, Cout), Cin)
    wsc = winit(ks[7], (Cin, Cout), Cin)              # shortcut 1x1 (bias=True)
    bsc = winit(ks[8], (1, Cout), Cin)
    params = (w1, b1, w2, b2, wid, bid, wsc, bsc)

    # Input built NCHW (PyTorch convention), transposed once to NHWC.
    x_nchw = jax.random.normal(ks[0], (N, Cin, H, W), jnp.float32)
    x = jnp.transpose(x_nchw, (0, 2, 3, 1))

    fwd = jax.jit(subspace_forward)
    out = fwd(x, params)
    jax.block_until_ready(out)

    ref = subspace_reference(x, params)
    assert out.shape == (N, H, W, Cout)
    # bf16 MXU operands with f32 accumulation: relaxed tolerance vs f32 reference.
    assert jnp.max(jnp.abs(out - ref)) < 5e-2, "mismatch vs pure-JAX reference"

    print("KERNEL_OK")
</pallas_src>

<mosaic_0001>
module attributes {stable_mosaic.version = 11 : i64} {
  func.func @kernel(%arg0: i32, %arg1: memref<40x64xf32, #tpu.memory_space<vmem>>, %arg2: memref<3x64x256xbf16, #tpu.memory_space<vmem>>, %arg3: memref<3x128x128xbf16, #tpu.memory_space<vmem>>, %arg4: memref<3x128xf32, #tpu.memory_space<vmem>>, %arg5: memref<40x128xf32, #tpu.memory_space<vmem>>) attributes {dimension_semantics = [#tpu.dimension_semantics<parallel>], iteration_bounds = array<i64: 1>, scalar_prefetch = 0 : i64, scratch_operands = 0 : i64, tpu.core_type = #tpu.core_type<tc>, window_params = [{transform_indices = @transform_0, window_bounds = array<i64: 40, 64>}, {pipeline_mode = #tpu.pipeline_mode<synchronous>, transform_indices = @transform_1, window_bounds = array<i64: 3, 64, 256>}, {pipeline_mode = #tpu.pipeline_mode<synchronous>, transform_indices = @transform_2, window_bounds = array<i64: 3, 128, 128>}, {pipeline_mode = #tpu.pipeline_mode<synchronous>, transform_indices = @transform_3, window_bounds = array<i64: 3, 128>}, {transform_indices = @transform_4, window_bounds = array<i64: 40, 128>}]} {
    %c0 = arith.constant 0 : index
    %c0_0 = arith.constant 0 : index
    %0 = vector.load %arg1[%c0, %c0_0] : memref<40x64xf32, #tpu.memory_space<vmem>>, vector<40x64xf32>
    %c0_1 = arith.constant 0 : index
    %c0_2 = arith.constant 0 : index
    %1 = vector.load %arg4[%c0_1, %c0_2] : memref<3x128xf32, #tpu.memory_space<vmem>>, vector<3x128xf32>
    %2 = vector.extract_strided_slice %0 {offsets = [0, 0], sizes = [38, 64], strides = [1, 1]} : vector<40x64xf32> to vector<38x64xf32>
    %3 = arith.truncf %2 : vector<38x64xf32> to vector<38x64xbf16>
    %c0_3 = arith.constant 0 : index
    %c0_4 = arith.constant 0 : index
    %c0_5 = arith.constant 0 : index
    %4 = vector.load %arg2[%c0_3, %c0_4, %c0_5] : memref<3x64x256xbf16, #tpu.memory_space<vmem>>, vector<1x64x256xbf16>
    %5 = vector.shape_cast %4 : vector<1x64x256xbf16> to vector<64x256xbf16>
    %cst = arith.constant dense<0.000000e+00> : vector<38x256xf32>
    %6 = tpu.matmul %3, %5, %cst {dimension_numbers = #tpu.dot_dimension_numbers<[1], [0], [0], [1], [0, 0, 1, 1], [], []>} : vector<38x64xbf16>, vector<64x256xbf16>, vector<38x256xf32> -> vector<38x256xf32>
    %7 = vector.extract_strided_slice %0 {offsets = [1, 0], sizes = [38, 64], strides = [1, 1]} : vector<40x64xf32> to vector<38x64xf32>
    %8 = arith.truncf %7 : vector<38x64xf32> to vector<38x64xbf16>
    %c1 = arith.constant 1 : index
    %c0_6 = arith.constant 0 : index
    %c0_7 = arith.constant 0 : index
    %9 = vector.load %arg2[%c1, %c0_6, %c0_7] : memref<3x64x256xbf16, #tpu.memory_space<vmem>>, vector<1x64x256xbf16>
    %10 = vector.shape_cast %9 : vector<1x64x256xbf16> to vector<64x256xbf16>
    %cst_8 = arith.constant dense<0.000000e+00> : vector<38x256xf32>
    %11 = tpu.matmul %8, %10, %cst_8 {dimension_numbers = #tpu.dot_dimension_numbers<[1], [0], [0], [1], [0, 0, 1, 1], [], []>} : vector<38x64xbf16>, vector<64x256xbf16>, vector<38x256xf32> -> vector<38x256xf32>
    %12 = arith.addf %6, %11 : vector<38x256xf32>
    %13 = vector.extract_strided_slice %0 {offsets = [2, 0], sizes = [38, 64], strides = [1, 1]} : vector<40x64xf32> to vector<38x64xf32>
    %14 = arith.truncf %13 : vector<38x64xf32> to vector<38x64xbf16>
    %c2 = arith.constant 2 : index
    %c0_9 = arith.constant 0 : index
    %c0_10 = arith.constant 0 : index
    %15 = vector.load %arg2[%c2, %c0_9, %c0_10] : memref<3x64x256xbf16, #tpu.memory_space<vmem>>, vector<1x64x256xbf16>
    %16 = vector.shape_cast %15 : vector<1x64x256xbf16> to vector<64x256xbf16>
    %cst_11 = arith.constant dense<0.000000e+00> : vector<38x256xf32>
    %17 = tpu.matmul %14, %16, %cst_11 {dimension_numbers = #tpu.dot_dimension_numbers<[1], [0], [0], [1], [0, 0, 1, 1], [], []>} : vector<38x64xbf16>, vector<64x256xbf16>, vector<38x256xf32> -> vector<38x256xf32>
    %18 = arith.addf %12, %17 : vector<38x256xf32>
    %19 = vector.extract_strided_slice %18 {offsets = [0, 0], sizes = [38, 128], strides = [1, 1]} : vector<38x256xf32> to vector<38x128xf32>
    %20 = vector.extract_strided_slice %1 {offsets = [0, 0], sizes = [1, 128], strides = [1, 1]} : vector<3x128xf32> to vector<1x128xf32>
    %21 = vector.broadcast %20 : vector<1x128xf32> to vector<38x128xf32>
    %22 = arith.addf %19, %21 : vector<38x128xf32>
    %cst_12 = arith.constant 2.000000e-01 : f32
    %23 = vector.broadcast %cst_12 : f32 to vector<38x128xf32>
    %24 = arith.mulf %23, %22 : vector<38x128xf32>
    %25 = arith.maximumf %22, %24 : vector<38x128xf32>
    %26 = vector.extract_strided_slice %18 {offsets = [0, 128], sizes = [38, 128], strides = [1, 1]} : vector<38x256xf32> to vector<38x128xf32>
    %27 = vector.extract_strided_slice %1 {offsets = [2, 0], sizes = [1, 128], strides = [1, 1]} : vector<3x128xf32> to vector<1x128xf32>
    %28 = vector.broadcast %27 : vector<1x128xf32> to vector<38x128xf32>
    %29 = arith.addf %26, %28 : vector<38x128xf32>
    %30 = tpu.iota {dimensions = array<i32: 0>} : vector<38x1xi32>
    %c20_i32 = arith.constant 20 : i32
    %c0_i32 = arith.constant 0 : i32
    %31 = arith.cmpi eq, %c20_i32, %c0_i32 : i32
    %c1_i32 = arith.constant 1 : i32
    %32 = arith.select %31, %c1_i32, %c20_i32 : i32
    %33 = vector.broadcast %32 : i32 to vector<38x1xi32>
    %34 = arith.remsi %30, %33 : vector<38x1xi32>
    %c0_i32_13 = arith.constant 0 : i32
    %35 = vector.broadcast %c0_i32_13 : i32 to vector<38x1xi32>
    %36 = arith.cmpi ne, %34, %35 : vector<38x1xi32>
    %c0_i32_14 = arith.constant 0 : i32
    %37 = vector.broadcast %c0_i32_14 : i32 to vector<38x1xi32>
    %38 = arith.cmpi slt, %34, %37 : vector<38x1xi32>
    %c0_i32_15 = arith.constant 0 : i32
    %39 = arith.cmpi slt, %32, %c0_i32_15 : i32
    %40 = vector.broadcast %39 : i1 to vector<38x1xi1>
    %41 = vector.broadcast %40 : vector<38x1xi1> to vector<38x1xi1>
    %42 = arith.xori %38, %41 : vector<38x1xi1>
    %43 = arith.andi %42, %36 : vector<38x1xi1>
    %44 = vector.broadcast %32 : i32 to vector<38x1xi32>
    %45 = arith.addi %34, %44 : vector<38x1xi32>
    %46 = arith.select %43, %45, %34 : vector<38x1xi1>, vector<38x1xi32>
    %c1_i32_16 = arith.constant 1 : i32
    %47 = vector.broadcast %c1_i32_16 : i32 to vector<38x1xi32>
    %48 = arith.cmpi sge, %46, %47 : vector<38x1xi32>
    %c16_i32 = arith.constant 16 : i32
    %49 = vector.broadcast %c16_i32 : i32 to vector<38x1xi32>
    %50 = arith.cmpi sle, %46, %49 : vector<38x1xi32>
    %51 = arith.andi %48, %50 : vector<38x1xi1>
    %cst_17 = arith.constant 0.000000e+00 : f32
    %52 = vector.shape_cast %51 : vector<38x1xi1> to vector<38x1xi1>
    %53 = vector.broadcast %52 : vector<38x1xi1> to vector<38x128xi1>
    %54 = vector.broadcast %cst_17 : f32 to vector<38x128xf32>
    %55 = arith.select %53, %25, %54 : vector<38x128xi1>, vector<38x128xf32>
    %56 = vector.extract_strided_slice %55 {offsets = [0, 0], sizes = [36, 128], strides = [1, 1]} : vector<38x128xf32> to vector<36x128xf32>
    %57 = arith.truncf %56 : vector<36x128xf32> to vector<36x128xbf16>
    %c0_18 = arith.constant 0 : index
    %c0_19 = arith.constant 0 : index
    %c0_20 = arith.constant 0 : index
    %58 = vector.load %arg3[%c0_18, %c0_19, %c0_20] : memref<3x128x128xbf16, #tpu.memory_space<vmem>>, vector<1x128x128xbf16>
    %59 = vector.shape_cast %58 : vector<1x128x128xbf16> to vector<128x128xbf16>
    %cst_21 = arith.constant dense<0.000000e+00> : vector<36x128xf32>
    %60 = tpu.matmul %57, %59, %cst_21 {dimension_numbers = #tpu.dot_dimension_numbers<[1], [0], [0], [1], [0, 0, 1, 1], [], []>} : vector<36x128xbf16>, vector<128x128xbf16>, vector<36x128xf32> -> vector<36x128xf32>
    %61 = vector.extract_strided_slice %55 {offsets = [1, 0], sizes = [36, 128], strides = [1, 1]} : vector<38x128xf32> to vector<36x128xf32>
    %62 = arith.truncf %61 : vector<36x128xf32> to vector<36x128xbf16>
    %c1_22 = arith.constant 1 : index
    %c0_23 = arith.constant 0 : index
    %c0_24 = arith.constant 0 : index
    %63 = vector.load %arg3[%c1_22, %c0_23, %c0_24] : memref<3x128x128xbf16, #tpu.memory_space<vmem>>, vector<1x128x128xbf16>
    %64 = vector.shape_cast %63 : vector<1x128x128xbf16> to vector<128x128xbf16>
    %cst_25 = arith.constant dense<0.000000e+00> : vector<36x128xf32>
    %65 = tpu.matmul %62, %64, %cst_25 {dimension_numbers = #tpu.dot_dimension_numbers<[1], [0], [0], [1], [0, 0, 1, 1], [], []>} : vector<36x128xbf16>, vector<128x128xbf16>, vector<36x128xf32> -> vector<36x128xf32>
    %66 = arith.addf %60, %65 : vector<36x128xf32>
    %67 = vector.extract_strided_slice %55 {offsets = [2, 0], sizes = [36, 128], strides = [1, 1]} : vector<38x128xf32> to vector<36x128xf32>
    %68 = arith.truncf %67 : vector<36x128xf32> to vector<36x128xbf16>
    %c2_26 = arith.constant 2 : index
    %c0_27 = arith.constant 0 : index
    %c0_28 = arith.constant 0 : index
    %69 = vector.load %arg3[%c2_26, %c0_27, %c0_28] : memref<3x128x128xbf16, #tpu.memory_space<vmem>>, vector<1x128x128xbf16>
    %70 = vector.shape_cast %69 : vector<1x128x128xbf16> to vector<128x128xbf16>
    %cst_29 = arith.constant dense<0.000000e+00> : vector<36x128xf32>
    %71 = tpu.matmul %68, %70, %cst_29 {dimension_numbers = #tpu.dot_dimension_numbers<[1], [0], [0], [1], [0, 0, 1, 1], [], []>} : vector<36x128xbf16>, vector<128x128xbf16>, vector<36x128xf32> -> vector<36x128xf32>
    %72 = arith.addf %66, %71 : vector<36x128xf32>
    %73 = vector.extract_strided_slice %1 {offsets = [1, 0], sizes = [1, 128], strides = [1, 1]} : vector<3x128xf32> to vector<1x128xf32>
    %74 = vector.broadcast %73 : vector<1x128xf32> to vector<36x128xf32>
    %75 = arith.addf %72, %74 : vector<36x128xf32>
    %cst_30 = arith.constant 2.000000e-01 : f32
    %76 = vector.broadcast %cst_30 : f32 to vector<36x128xf32>
    %77 = arith.mulf %76, %75 : vector<36x128xf32>
    %78 = arith.maximumf %75, %77 : vector<36x128xf32>
    %79 = vector.extract_strided_slice %29 {offsets = [1, 0], sizes = [36, 128], strides = [1, 1]} : vector<38x128xf32> to vector<36x128xf32>
    %80 = arith.addf %78, %79 : vector<36x128xf32>
    %c0_31 = arith.constant 0 : index
    %c0_32 = arith.constant 0 : index
    %81 = vector.load %arg5[%c0_31, %c0_32] : memref<40x128xf32, #tpu.memory_space<vmem>>, vector<36x128xf32>
    tpu.vector_store %arg5[%c0_31, %c0_32], %80 {strides = array<i32>} : memref<40x128xf32, #tpu.memory_space<vmem>>, vector<36x128xf32>,
    return
  }
  func.func @transform_0(%arg0: i32) -> (i32, i32) {
    %c0_i32 = arith.constant 0 : i32
    %c0_i32_0 = arith.constant 0 : i32
    return %arg0, %c0_i32 : i32, i32
  }
  func.func @transform_1(%arg0: i32) -> (i32, i32, i32) {
    %c0_i32 = arith.constant 0 : i32
    %c0_i32_0 = arith.constant 0 : i32
    %c0_i32_1 = arith.constant 0 : i32
    %c0_i32_2 = arith.constant 0 : i32
    return %c0_i32, %c0_i32_0, %c0_i32_1 : i32, i32, i32
  }
  func.func @transform_2(%arg0: i32) -> (i32, i32, i32) {
    %c0_i32 = arith.constant 0 : i32
    %c0_i32_0 = arith.constant 0 : i32
    %c0_i32_1 = arith.constant 0 : i32
    %c0_i32_2 = arith.constant 0 : i32
    return %c0_i32, %c0_i32_0, %c0_i32_1 : i32, i32, i32
  }
  func.func @transform_3(%arg0: i32) -> (i32, i32) {
    %c0_i32 = arith.constant 0 : i32
    %c0_i32_0 = arith.constant 0 : i32
    %c0_i32_1 = arith.constant 0 : i32
    return %c0_i32, %c0_i32_0 : i32, i32
  }
  func.func @transform_4(%arg0: i32) -> (i32, i32) {
    %c0_i32 = arith.constant 0 : i32
    %c0_i32_0 = arith.constant 0 : i32
    return %arg0, %c0_i32 : i32, i32
  }
}

</mosaic_0001>

<llo_original>
// kernel: subspace_forward.1
$region0: #{subspace_forward.1}
  #allocation0 [shape = 'u32[]', space=smem, size = 0x4, offset = 0x4, fixed_abs, tag = 'smem constant byte address 0x4 - core index']
  #allocation1 [shape = 'u32[144,128]{1,0:T(1,128)}', space=vmem, size = 0x12000, scoped, tag = 'internal scratch']
  %s0 = inlined_call_operand.vmem [shape: f32[40,64], index: 0, kind: input, shape index: {}]
  %s1 = inlined_call_operand.vmem [shape: bf16[3,64,256], index: 1, kind: input, shape index: {}]
  %s2 = inlined_call_operand.vmem [shape: bf16[3,128,128], index: 2, kind: input, shape index: {}]
  %s3 = inlined_call_operand.vmem [shape: f32[3,128], index: 3, kind: input, shape index: {}]
  %s4 = inlined_call_operand.vmem [shape: f32[40,128], index: 4, kind: output, shape index: {}]
  %s5 = sld [smem:[#allocation0]]
  $region26: #{subspace_forward.1} parent=0
    _
  %s7 = ssub.s32 1, %s5
  %s8 = scalar_select 0, %s7, %s5
  // Predicated region
  $region2: #{subspace_forward.1} parent=0 // pred_check
    _
  $region3: #{subspace_forward.1} parent=0 // pred_check_branch
    %10 = sbr.rel (0) target = $region5
  $region4: #{subspace_forward.1} parent=0 // pred_region
    _
  $region5: #{subspace_forward.1} parent=0 // pred_fallthru
    _
  // Predicated region
  $region6: #{subspace_forward.1} parent=0 // pred_check
    _
  $region7: #{subspace_forward.1} parent=0 // pred_check_branch
    %12 = sbr.rel (0) target = $region9
  $region8: #{subspace_forward.1} parent=0 // pred_region
    _
  $region9: #{subspace_forward.1} parent=0 // pred_fallthru
    _
  // Predicated region
  $region10: #{subspace_forward.1} parent=0 // pred_check
    _
  $region11: #{subspace_forward.1} parent=0 // pred_check_branch
    %14 = sbr.rel (0) target = $region13
  $region12: #{subspace_forward.1} parent=0 // pred_region
    _
  $region13: #{subspace_forward.1} parent=0 // pred_fallthru
    _
  // Predicated region
  $region14: #{subspace_forward.1} parent=0 // pred_check
    _
  $region15: #{subspace_forward.1} parent=0 // pred_check_branch
    %16 = sbr.rel (0) target = $region17
  $region16: #{subspace_forward.1} parent=0 // pred_region
    _
  $region17: #{subspace_forward.1} parent=0 // pred_fallthru
    _
  %v18 = vld [vmem:[%s0] sm:$0xff]
  %v19 = vld [vmem:[%s0 + $0x8] sm:$0xff]
  %v20 = vld [vmem:[%s0 + $0x10] sm:$0xff]
  %v21 = vld [vmem:[%s0 + $0x18] sm:$0xff]
  %v22 = vld [vmem:[%s0 + $0x20] sm:$0xff]
  %v23 = vld [vmem:[%s3] sm:$0x7]
  %v24 = vpack.c.bf16 %v19, %v18
  %v25 = vpack.c.bf16 %v21, %v20
  %v26 = vpack.c.bf16 %v22, %v22
  %v27 = vld [vmem:[%s1] sm:$0xff]
  %v28 = vld [vmem:[%s1 + $0x8] sm:$0xff]
  %v29 = vld [vmem:[%s1 + $0x10] sm:$0xff]
  %v30 = vld [vmem:[%s1 + $0x18] sm:$0xff]
  %v31 = vld [vmem:[%s1 + $0x20] sm:$0xff]
  %v32 = vld [vmem:[%s1 + $0x28] sm:$0xff]
  %v33 = vld [vmem:[%s1 + $0x30] sm:$0xff]
  %v34 = vld [vmem:[%s1 + $0x38] sm:$0xff]
  %s35 = scalar_lea.vmem %s1, 64
  %v36 = vld [vmem:[%s35] sm:$0xff]
  %v37 = vld [vmem:[%s35 + $0x8] sm:$0xff]
  %v38 = vld [vmem:[%s35 + $0x10] sm:$0xff]
  %v39 = vld [vmem:[%s35 + $0x18] sm:$0xff]
  %v40 = vld [vmem:[%s35 + $0x20] sm:$0xff]
  %v41 = vld [vmem:[%s35 + $0x28] sm:$0xff]
  %v42 = vld [vmem:[%s35 + $0x30] sm:$0xff]
  %v43 = vld [vmem:[%s35 + $0x38] sm:$0xff]
  %vm44 = vsmask.f32 7424
  %v46 = vshrl.u32 %v24, 16
  %v48 = vshll.u32 %v24, 16
  %v50 = vrot.slane %v48, 1
  %v51 = vor.u32 %v46, %v50
  %v53 = vshll.u32 %v25, 16
  %v55 = vrot.slane %v53, 1
  %v56 = vsel %vm44, %v51, %v55
  %v57 = vshrl.u32 %v25, 16
  %v59 = vor.u32 %v57, %v55
  %v61 = vshll.u32 %v26, 16
  %v63 = vrot.slane %v61, 1
  %v64 = vsel %vm44, %v59, %v63
  %v65 = vshrl.u32 %v26, 16
  %v67 = vor.u32 %v65, %v63
  %v76 = vunpack.c.l.b16 %v36
  %v77 = vunpack.c.h.b16 %v36
  %v78 = vunpack.c.l.b16 %v37
  %v79 = vunpack.c.h.b16 %v37
  %v80 = vunpack.c.l.b16 %v38
  %v81 = vunpack.c.h.b16 %v38
  %v82 = vunpack.c.l.b16 %v39
  %v83 = vunpack.c.h.b16 %v39
  %v84 = vunpack.c.l.b16 %v40
  %v85 = vunpack.c.h.b16 %v40
  %v86 = vunpack.c.l.b16 %v41
  %v87 = vunpack.c.h.b16 %v41
  %v88 = vunpack.c.l.b16 %v42
  %v89 = vunpack.c.h.b16 %v42
  %v90 = vunpack.c.l.b16 %v43
  %v91 = vunpack.c.h.b16 %v43
  %v92 = vpack.c.b16 %v78, %v76
  %v93 = vpack.c.b16 %v79, %v77
  %v94 = vpack.c.b16 %v82, %v80
  %v95 = vpack.c.b16 %v83, %v81
  %v96 = vpack.c.b16 %v86, %v84
  %v97 = vpack.c.b16 %v87, %v85
  %v98 = vpack.c.b16 %v90, %v88
  %v99 = vpack.c.b16 %v91, %v89
  %vm108 = vcmask 523264
  %v110 = vsel %vm108, %v56, 0
  %v113 = vsel %vm108, %v64, 0
  %v116 = vsel %vm108, %v67, 0
  %118 = vmatprep.subr.bf16.mxu0 %v93
  %119 = vmatpush1.bf16.msra.mxu0 %v92
  %120 = vmatprep.subr.bf16.mxu0 %v95
  %121 = vmatpush1.bf16.msra.mxu0 %v94
  %122 = vmatprep.subr.bf16.mxu0 %v97
  %123 = vmatpush1.bf16.msra.mxu0 %v96
  %124 = vmatprep.subr.bf16.mxu0 %v99
  %125 = vmatpush1.bf16.msra.mxu0 %v98
  %126 = vmatprep.subr.bf16.mxu0 0
  %127 = vmatpush1.bf16.msra.mxu0 0
  %128 = vmatprep.subr.bf16.mxu0 0
  %129 = vmatpush1.bf16.msra.mxu0 0
  %130 = vmatprep.subr.bf16.mxu0 0
  %131 = vmatpush1.bf16.msra.mxu0 0
  %132 = vmatprep.subr.bf16.mxu0 0
  %133 = vmatpush1.bf16.msra.mxu0 0
  %134 = vmatprep.subr.bf16.mxu0 0
  %135 = vmatpush1.bf16.msra.mxu0 0
  %136 = vmatprep.subr.bf16.mxu0 0
  %137 = vmatpush1.bf16.msra.mxu0 0
  %138 = vmatprep.subr.bf16.mxu0 0
  %139 = vmatpush1.bf16.msra.mxu0 0
  %140 = vmatprep.subr.bf16.mxu0 0
  %141 = vmatpush1.bf16.msra.mxu0 0
  %142 = vmatprep.subr.bf16.mxu0 0
  %143 = vmatpush1.bf16.msra.mxu0 0
  %144 = vmatprep.subr.bf16.mxu0 0
  %145 = vmatpush1.bf16.msra.mxu0 0
  %146 = vmatprep.subr.bf16.mxu0 0
  %147 = vmatpush1.bf16.msra.mxu0 0
  %148 = vmatprep.subr.bf16.mxu0 0
  %149 = vmatpush1.bf16.msra.mxu0 0
  %150 = vmatprep.mubr.bf16.mxu0 0
  %151 = vmatmul.mubr.bf16.gmra.mrb[0].mxu0 %v110
  %v152 = vpop.f32.mrb[0].mxu0
  %v153 = vadd.f32 0.0, %v152
  %v154 = vpop.f32.mrb[0].mxu0
  %v155 = vadd.f32 0.0, %v154
  %v156 = vpop.f32.mrb[0].mxu0
  %v157 = vadd.f32 0.0, %v156
  %v158 = vpop.f32.mrb[0].mxu0
  %v159 = vadd.f32 0.0, %v158
  %160 = vmatprep.mubr.bf16.mxu0 0
  %161 = vmatmul.mubr.bf16.gmra.mrb[0].mxu0 %v113
  %v162 = vpop.f32.mrb[0].mxu0
  %v163 = vadd.f32 0.0, %v162
  %v164 = vpop.f32.mrb[0].mxu0
  %v165 = vadd.f32 0.0, %v164
  %v166 = vpop.f32.mrb[0].mxu0
  %v167 = vadd.f32 0.0, %v166
  %v168 = vpop.f32.mrb[0].mxu0
  %v169 = vadd.f32 0.0, %v168
  %170 = vmatprep.mubr.bf16.mxu0 0
  %171 = vmatmul.mubr.bf16.gmra.mrb[0].mxu0 %v116
  %v172 = vpop.f32.mrb[0].mxu0
  %v173 = vadd.f32 0.0, %v172
  %v174 = vpop.f32.mrb[0].mxu0
  %v175 = vadd.f32 0.0, %v174
  %v176 = vpop.f32.mrb[0].mxu0
  %v177 = vpop.f32.mrb[0].mxu0
  %178 = vdwg.mxu0
  %v187 = vunpack.c.l.b16 %v27
  %v188 = vunpack.c.h.b16 %v27
  %v189 = vunpack.c.l.b16 %v28
  %v190 = vunpack.c.h.b16 %v28
  %v191 = vunpack.c.l.b16 %v29
  %v192 = vunpack.c.h.b16 %v29
  %v193 = vunpack.c.l.b16 %v30
  %v194 = vunpack.c.h.b16 %v30
  %v195 = vunpack.c.l.b16 %v31
  %v196 = vunpack.c.h.b16 %v31
  %v197 = vunpack.c.l.b16 %v32
  %v198 = vunpack.c.h.b16 %v32
  %v199 = vunpack.c.l.b16 %v33
  %v200 = vunpack.c.h.b16 %v33
  %v201 = vunpack.c.l.b16 %v34
  %v202 = vunpack.c.h.b16 %v34
  %v203 = vpack.c.b16 %v189, %v187
  %v204 = vpack.c.b16 %v190, %v188
  %v205 = vpack.c.b16 %v193, %v191
  %v206 = vpack.c.b16 %v194, %v192
  %v207 = vpack.c.b16 %v197, %v195
  %v208 = vpack.c.b16 %v198, %v196
  %v209 = vpack.c.b16 %v201, %v199
  %v210 = vpack.c.b16 %v202, %v200
  %v219 = vsel %vm108, %v24, 0
  %v221 = vsel %vm108, %v25, 0
  %v223 = vsel %vm108, %v26, 0
  %225 = vmatprep.subr.bf16.mxu0 %v204
  %226 = vmatpush1.bf16.msra.mxu0 %v203
  %227 = vmatprep.subr.bf16.mxu0 %v206
  %228 = vmatpush1.bf16.msra.mxu0 %v205
  %229 = vmatprep.subr.bf16.mxu0 %v208
  %230 = vmatpush1.bf16.msra.mxu0 %v207
  %231 = vmatprep.subr.bf16.mxu0 %v210
  %232 = vmatpush1.bf16.msra.mxu0 %v209
  %233 = vmatprep.subr.bf16.mxu0 0
  %234 = vmatpush1.bf16.msra.mxu0 0
  %235 = vmatprep.subr.bf16.mxu0 0
  %236 = vmatpush1.bf16.msra.mxu0 0
  %237 = vmatprep.subr.bf16.mxu0 0
  %238 = vmatpush1.bf16.msra.mxu0 0
  %239 = vmatprep.subr.bf16.mxu0 0
  %240 = vmatpush1.bf16.msra.mxu0 0
  %241 = vmatprep.subr.bf16.mxu0 0
  %242 = vmatpush1.bf16.msra.mxu0 0
  %243 = vmatprep.subr.bf16.mxu0 0
  %244 = vmatpush1.bf16.msra.mxu0 0
  %245 = vmatprep.subr.bf16.mxu0 0
  %246 = vmatpush1.bf16.msra.mxu0 0
  %247 = vmatprep.subr.bf16.mxu0 0
  %248 = vmatpush1.bf16.msra.mxu0 0
  %249 = vmatprep.subr.bf16.mxu0 0
  %250 = vmatpush1.bf16.msra.mxu0 0
  %251 = vmatprep.subr.bf16.mxu0 0
  %252 = vmatpush1.bf16.msra.mxu0 0
  %253 = vmatprep.subr.bf16.mxu0 0
  %254 = vmatpush1.bf16.msra.mxu0 0
  %255 = vmatprep.subr.bf16.mxu0 0
  %256 = vmatpush1.bf16.msra.mxu0 0
  %257 = vmatprep.mubr.bf16.mxu0 0
  %258 = vmatmul.mubr.bf16.gmra.mrb[0].mxu0 %v219
  %v259 = vpop.f32.mrb[0].mxu0
  %v260 = vadd.f32 %v153, %v259
  %v261 = vpop.f32.mrb[0].mxu0
  %v262 = vadd.f32 %v155, %v261
  %v263 = vpop.f32.mrb[0].mxu0
  %v264 = vadd.f32 %v157, %v263
  %v265 = vpop.f32.mrb[0].mxu0
  %v266 = vadd.f32 %v159, %v265
  %267 = vmatprep.mubr.bf16.mxu0 0
  %268 = vmatmul.mubr.bf16.gmra.mrb[0].mxu0 %v221
  %v269 = vpop.f32.mrb[0].mxu0
  %v270 = vadd.f32 %v163, %v269
  %v271 = vpop.f32.mrb[0].mxu0
  %v272 = vadd.f32 %v165, %v271
  %v273 = vpop.f32.mrb[0].mxu0
  %v274 = vadd.f32 %v167, %v273
  %v275 = vpop.f32.mrb[0].mxu0
  %v276 = vadd.f32 %v169, %v275
  %277 = vmatprep.mubr.bf16.mxu0 0
  %278 = vmatmul.mubr.bf16.gmra.mrb[0].mxu0 %v223
  %v279 = vpop.f32.mrb[0].mxu0
  %v280 = vadd.f32 %v173, %v279
  %v281 = vpop.f32.mrb[0].mxu0
  %v282 = vadd.f32 %v175, %v281
  %v283 = vpop.f32.mrb[0].mxu0
  %v284 = vpop.f32.mrb[0].mxu0
  %285 = vdwg.mxu0
  %s286 = scalar_lea.vmem %s1, 128
  %v287 = vld [vmem:[%s286] sm:$0xff]
  %v288 = vld [vmem:[%s286 + $0x8] sm:$0xff]
  %v289 = vld [vmem:[%s286 + $0x10] sm:$0xff]
  %v290 = vld [vmem:[%s286 + $0x18] sm:$0xff]
  %v291 = vld [vmem:[%s286 + $0x20] sm:$0xff]
  %v292 = vld [vmem:[%s286 + $0x28] sm:$0xff]
  %v293 = vld [vmem:[%s286 + $0x30] sm:$0xff]
  %v294 = vld [vmem:[%s286 + $0x38] sm:$0xff]
  %vm298 = vcmask 1046528
  %v299 = vrot.slane %v24, 1
  %v300 = vrot.slane %v25, 1
  %v301 = vsel %vm298, %v299, %v300
  %v302 = vrot.slane %v26, 1
  %v303 = vsel %vm298, %v300, %v302
  %v312 = vunpack.c.l.b16 %v287
  %v313 = vunpack.c.h.b16 %v287
  %v314 = vunpack.c.l.b16 %v288
  %v315 = vunpack.c.h.b16 %v288
  %v316 = vunpack.c.l.b16 %v289
  %v317 = vunpack.c.h.b16 %v289
  %v318 = vunpack.c.l.b16 %v290
  %v319 = vunpack.c.h.b16 %v290
  %v320 = vunpack.c.l.b16 %v291
  %v321 = vunpack.c.h.b16 %v291
  %v322 = vunpack.c.l.b16 %v292
  %v323 = vunpack.c.h.b16 %v292
  %v324 = vunpack.c.l.b16 %v293
  %v325 = vunpack.c.h.b16 %v293
  %v326 = vunpack.c.l.b16 %v294
  %v327 = vunpack.c.h.b16 %v294
  %v328 = vpack.c.b16 %v314, %v312
  %v329 = vpack.c.b16 %v315, %v313
  %v330 = vpack.c.b16 %v318, %v316
  %v331 = vpack.c.b16 %v319, %v317
  %v332 = vpack.c.b16 %v322, %v320
  %v333 = vpack.c.b16 %v323, %v321
  %v334 = vpack.c.b16 %v326, %v324
  %v335 = vpack.c.b16 %v327, %v325
  %v345 = vsel %vm108, %v301, 0
  %v348 = vsel %vm108, %v303, 0
  %v351 = vsel %vm108, %v302, 0
  %353 = vmatprep.subr.bf16.mxu0 %v329
  %354 = vmatpush1.bf16.msra.mxu0 %v328
  %355 = vmatprep.subr.bf16.mxu0 %v331
  %356 = vmatpush1.bf16.msra.mxu0 %v330
  %357 = vmatprep.subr.bf16.mxu0 %v333
  %358 = vmatpush1.bf16.msra.mxu0 %v332
  %359 = vmatprep.subr.bf16.mxu0 %v335
  %360 = vmatpush1.bf16.msra.mxu0 %v334
  %361 = vmatprep.subr.bf16.mxu0 0
  %362 = vmatpush1.bf16.msra.mxu0 0
  %363 = vmatprep.subr.bf16.mxu0 0
  %364 = vmatpush1.bf16.msra.mxu0 0
  %365 = vmatprep.subr.bf16.mxu0 0
  %366 = vmatpush1.bf16.msra.mxu0 0
  %367 = vmatprep.subr.bf16.mxu0 0
  %368 = vmatpush1.bf16.msra.mxu0 0
  %369 = vmatprep.subr.bf16.mxu0 0
  %370 = vmatpush1.bf16.msra.mxu0 0
  %371 = vmatprep.subr.bf16.mxu0 0
  %372 = vmatpush1.bf16.msra.mxu0 0
  %373 = vmatprep.subr.bf16.mxu0 0
  %374 = vmatpush1.bf16.msra.mxu0 0
  %375 = vmatprep.subr.bf16.mxu0 0
  %376 = vmatpush1.bf16.msra.mxu0 0
  %377 = vmatprep.subr.bf16.mxu0 0
  %378 = vmatpush1.bf16.msra.mxu0 0
  %379 = vmatprep.subr.bf16.mxu0 0
  %380 = vmatpush1.bf16.msra.mxu0 0
  %381 = vmatprep.subr.bf16.mxu0 0
  %382 = vmatpush1.bf16.msra.mxu0 0
  %383 = vmatprep.subr.bf16.mxu0 0
  %384 = vmatpush1.bf16.msra.mxu0 0
  %385 = vmatprep.mubr.bf16.mxu0 0
  %386 = vmatmul.mubr.bf16.gmra.mrb[0].mxu0 %v345
  %v387 = vpop.f32.mrb[0].mxu0
  %v388 = vadd.f32 0.0, %v387
  %v389 = vpop.f32.mrb[0].mxu0
  %v390 = vadd.f32 0.0, %v389
  %v391 = vpop.f32.mrb[0].mxu0
  %v392 = vadd.f32 0.0, %v391
  %v393 = vpop.f32.mrb[0].mxu0
  %v394 = vadd.f32 0.0, %v393
  %395 = vmatprep.mubr.bf16.mxu0 0
  %396 = vmatmul.mubr.bf16.gmra.mrb[0].mxu0 %v348
  %v397 = vpop.f32.mrb[0].mxu0
  %v398 = vadd.f32 0.0, %v397
  %v399 = vpop.f32.mrb[0].mxu0
  %v400 = vadd.f32 0.0, %v399
  %v401 = vpop.f32.mrb[0].mxu0
  %v402 = vadd.f32 0.0, %v401
  %v403 = vpop.f32.mrb[0].mxu0
  %v404 = vadd.f32 0.0, %v403
  %405 = vmatprep.mubr.bf16.mxu0 0
  %406 = vmatmul.mubr.bf16.gmra.mrb[0].mxu0 %v351
  %v407 = vpop.f32.mrb[0].mxu0
  %v408 = vadd.f32 0.0, %v407
  %v409 = vpop.f32.mrb[0].mxu0
  %v410 = vadd.f32 0.0, %v409
  %v411 = vpop.f32.mrb[0].mxu0
  %v412 = vpop.f32.mrb[0].mxu0
  %413 = vdwg.mxu0
  %v414 = vadd.f32 %v260, %v388
  %v415 = vadd.f32 %v262, %v390
  %v416 = vadd.f32 %v264, %v392
  %v417 = vadd.f32 %v266, %v394
  %v418 = vadd.f32 %v270, %v398
  %v419 = vadd.f32 %v272, %v400
  %v420 = vadd.f32 %v274, %v402
  %v421 = vadd.f32 %v276, %v404
  %v422 = vadd.f32 %v280, %v408
  %v423 = vadd.f32 %v282, %v410
  %v424 = vlaneseq
  %v425 = vshrl.u32 %v424, 7
  %v426 = vsub.s32 0, %v425
  %v427 = vrot.slane %v23, %v426
  %v428 = vadd.f32 %v414, %v427
  %v429 = vadd.f32 %v416, %v427
  %v430 = vadd.f32 %v418, %v427
  %v431 = vadd.f32 %v420, %v427
  %v432 = vadd.f32 %v422, %v427
  %v433 = vmul.f32 %v428, 0.2
  %v434 = vmul.f32 %v429, 0.2
  %v435 = vmul.f32 %v430, 0.2
  %v436 = vmul.f32 %v431, 0.2
  %v437 = vmul.f32 %v432, 0.2
  %v438 = vmax.f32 %v428, %v433
  %v439 = vmax.f32 %v429, %v434
  %v440 = vmax.f32 %v430, %v435
  %v441 = vmax.f32 %v431, %v436
  %v442 = vmax.f32 %v432, %v437
  %v443 = vlaneseq
  %v444 = vshrl.u32 %v443, 7
  %v445 = vsub.s32 2, %v444
  %v446 = vrot.slane %v23, %v445
  %v447 = vadd.f32 %v415, %v446
  %v448 = vadd.f32 %v417, %v446
  %v449 = vadd.f32 %v419, %v446
  %v450 = vadd.f32 %v421, %v446
  %v451 = vadd.f32 %v423, %v446
  %v452 = vlaneseq
  %v453 = vshrl.u32 %v452, 7
  %v454 = vadd.s32 %v453, 8
  %v455 = vadd.s32 %v453, 16
  %v456 = vadd.s32 %v453, 24
  %v457 = vadd.s32 %v453, 32
  %vm458 = vcmp.lt.s32.totalorder %v453, 0
  %v459 = vsub.s32 0, %v453
  %v460 = vsel %vm458, %v459, %v453
  %v461 = vmul.u32.u64.compose %v460, 3435973837
  %v462 = vextract.low.u32 %v461
  %v463 = vextract.high.u32 %v461
  %v464 = vshrl.u32 %v463, 4
  %v465 = vmul.u32 %v464, 20
  %v466 = vsub.s32 %v460, %v465
  %v467 = vsub.s32 0, %v466
  %v468 = vsel %vm458, %v467, %v466
  %vm469 = vcmp.lt.s32.totalorder %v454, 0
  %v470 = vsub.s32 0, %v454
  %v471 = vsel %vm469, %v470, %v454
  %v472 = vmul.u32.u64.compose %v471, 3435973837
  %v473 = vextract.low.u32 %v472
  %v474 = vextract.high.u32 %v472
  %v475 = vshrl.u32 %v474, 4
  %v476 = vmul.u32 %v475, 20
  %v477 = vsub.s32 %v471, %v476
  %v478 = vsub.s32 0, %v477
  %v479 = vsel %vm469, %v478, %v477
  %vm480 = vcmp.lt.s32.totalorder %v455, 0
  %v481 = vsub.s32 0, %v455
  %v482 = vsel %vm480, %v481, %v455
  %v483 = vmul.u32.u64.compose %v482, 3435973837
  %v484 = vextract.low.u32 %v483
  %v485 = vextract.high.u32 %v483
  %v486 = vshrl.u32 %v485, 4
  %v487 = vmul.u32 %v486, 20
  %v488 = vsub.s32 %v482, %v487
  %v489 = vsub.s32 0, %v488
  %v490 = vsel %vm480, %v489, %v488
  %vm491 = vcmp.lt.s32.totalorder %v456, 0
  %v492 = vsub.s32 0, %v456
  %v493 = vsel %vm491, %v492, %v456
  %v494 = vmul.u32.u64.compose %v493, 3435973837
  %v495 = vextract.low.u32 %v494
  %v496 = vextract.high.u32 %v494
  %v497 = vshrl.u32 %v496, 4
  %v498 = vmul.u32 %v497, 20
  %v499 = vsub.s32 %v493, %v498
  %v500 = vsub.s32 0, %v499
  %v501 = vsel %vm491, %v500, %v499
  %vm502 = vcmp.lt.s32.totalorder %v457, 0
  %v503 = vsub.s32 0, %v457
  %v504 = vsel %vm502, %v503, %v457
  %v505 = vmul.u32.u64.compose %v504, 3435973837
  %v506 = vextract.low.u32 %v505
  %v507 = vextract.high.u32 %v505
  %v508 = vshrl.u32 %v507, 4
  %v509 = vmul.u32 %v508, 20
  %v510 = vsub.s32 %v504, %v509
  %v511 = vsub.s32 0, %v510
  %v512 = vsel %vm502, %v511, %v510
  %vm513 = vcmp.ne.s32.totalorder %v468, 0
  %vm514 = vcmp.ne.s32.totalorder %v479, 0
  %vm515 = vcmp.ne.s32.totalorder %v490, 0
  %vm516 = vcmp.ne.s32.totalorder %v501, 0
  %vm517 = vcmp.ne.s32.totalorder %v512, 0
  %vm518 = vcmp.lt.s32.totalorder %v468, 0
  %vm519 = vcmp.lt.s32.totalorder %v479, 0
  %vm520 = vcmp.lt.s32.totalorder %v490, 0
  %vm521 = vcmp.lt.s32.totalorder %v501, 0
  %vm522 = vcmp.lt.s32.totalorder %v512, 0
  %vm523 = vmand %vm518, %vm513
  %vm524 = vmand %vm519, %vm514
  %vm525 = vmand %vm520, %vm515
  %vm526 = vmand %vm521, %vm516
  %vm527 = vmand %vm522, %vm517
  %v528 = vadd.s32 %v468, 20
  %v529 = vadd.s32 %v479, 20
  %v530 = vadd.s32 %v490, 20
  %v531 = vadd.s32 %v501, 20
  %v532 = vadd.s32 %v512, 20
  %v533 = vsel %vm523, %v528, %v468
  %v534 = vsel %vm524, %v529, %v479
  %v535 = vsel %vm525, %v530, %v490
  %v536 = vsel %vm526, %v531, %v501
  %v537 = vsel %vm527, %v532, %v512
  %vm538 = vcmp.ge.s32.totalorder %v533, 1
  %vm539 = vcmp.ge.s32.totalorder %v534, 1
  %vm540 = vcmp.ge.s32.totalorder %v535, 1
  %vm541 = vcmp.ge.s32.totalorder %v536, 1
  %vm542 = vcmp.ge.s32.totalorder %v537, 1
  %vm543 = vcmp.le.s32.totalorder %v533, 16
  %vm544 = vcmp.le.s32.totalorder %v534, 16
  %vm545 = vcmp.le.s32.totalorder %v535, 16
  %vm546 = vcmp.le.s32.totalorder %v536, 16
  %vm547 = vcmp.le.s32.totalorder %v537, 16
  %vm548 = vmand %vm538, %vm543
  %vm549 = vmand %vm539, %vm544
  %vm550 = vmand %vm540, %vm545
  %vm551 = vmand %vm541, %vm546
  %vm552 = vmand %vm542, %vm547
  %v553 = vsel %vm548, 1, 0
  %v554 = vsel %vm549, 1, 0
  %v555 = vsel %vm550, 1, 0
  %v556 = vsel %vm551, 1, 0
  %v557 = vsel %vm552, 1, 0
  %vm558 = vcmp.eq.s32.totalorder %v553, 1
  %vm559 = vcmp.eq.s32.totalorder %v554, 1
  %vm560 = vcmp.eq.s32.totalorder %v555, 1
  %vm561 = vcmp.eq.s32.totalorder %v556, 1
  %vm562 = vcmp.eq.s32.totalorder %v557, 1
  %v563 = vsel %vm558, %v438, 0.0
  %v564 = vsel %vm559, %v439, 0.0
  %v565 = vsel %vm560, %v440, 0.0
  %v566 = vsel %vm561, %v441, 0.0
  %v567 = vsel %vm562, %v442, 0.0
  %v568 = vpack.c.bf16 %v564, %v563
  %v569 = vpack.c.bf16 %v566, %v565
  %v570 = vpack.c.bf16 %v567, %v567
  %v571 = vld [vmem:[%s2] sm:$0xf]
  %v572 = vld [vmem:[%s2 + $0x4] sm:$0xf]
  %v573 = vld [vmem:[%s2 + $0x8] sm:$0xf]
  %v574 = vld [vmem:[%s2 + $0xc] sm:$0xf]
  %v575 = vld [vmem:[%s2 + $0x10] sm:$0xf]
  %v576 = vld [vmem:[%s2 + $0x14] sm:$0xf]
  %v577 = vld [vmem:[%s2 + $0x18] sm:$0xf]
  %v578 = vld [vmem:[%s2 + $0x1c] sm:$0xf]
  %v579 = vld [vmem:[%s2 + $0x20] sm:$0xf]
  %v580 = vld [vmem:[%s2 + $0x24] sm:$0xf]
  %v581 = vld [vmem:[%s2 + $0x28] sm:$0xf]
  %v582 = vld [vmem:[%s2 + $0x2c] sm:$0xf]
  %v583 = vld [vmem:[%s2 + $0x30] sm:$0xf]
  %v584 = vld [vmem:[%s2 + $0x34] sm:$0xf]
  %v585 = vld [vmem:[%s2 + $0x38] sm:$0xf]
  %v586 = vld [vmem:[%s2 + $0x3c] sm:$0xf]
  %s587 = scalar_lea.vmem %s2, 64
  %v588 = vld [vmem:[%s587] sm:$0xf]
  %v589 = vld [vmem:[%s587 + $0x4] sm:$0xf]
  %v590 = vld [vmem:[%s587 + $0x8] sm:$0xf]
  %v591 = vld [vmem:[%s587 + $0xc] sm:$0xf]
  %v592 = vld [vmem:[%s587 + $0x10] sm:$0xf]
  %v593 = vld [vmem:[%s587 + $0x14] sm:$0xf]
  %v594 = vld [vmem:[%s587 + $0x18] sm:$0xf]
  %v595 = vld [vmem:[%s587 + $0x1c] sm:$0xf]
  %v596 = vld [vmem:[%s587 + $0x20] sm:$0xf]
  %v597 = vld [vmem:[%s587 + $0x24] sm:$0xf]
  %v598 = vld [vmem:[%s587 + $0x28] sm:$0xf]
  %v599 = vld [vmem:[%s587 + $0x2c] sm:$0xf]
  %v600 = vld [vmem:[%s587 + $0x30] sm:$0xf]
  %v601 = vld [vmem:[%s587 + $0x34] sm:$0xf]
  %v602 = vld [vmem:[%s587 + $0x38] sm:$0xf]
  %v603 = vld [vmem:[%s587 + $0x3c] sm:$0xf]
  %v605 = vshrl.u32 %v568, 16
  %v607 = vshll.u32 %v568, 16
  %v609 = vrot.slane %v607, 1
  %v610 = vor.u32 %v605, %v609
  %v612 = vshll.u32 %v569, 16
  %v614 = vrot.slane %v612, 1
  %v615 = vsel %vm44, %v610, %v614
  %v616 = vshrl.u32 %v569, 16
  %v618 = vor.u32 %v616, %v614
  %v620 = vshll.u32 %v570, 16
  %v622 = vrot.slane %v620, 1
  %v623 = vsel %vm44, %v618, %v622
  %v624 = vshrl.u32 %v570, 16
  %v626 = vor.u32 %v624, %v622
  %v646 = vunpack.c.l.b16 %v588
  %v647 = vunpack.c.l.b16 %v589
  %v648 = vunpack.c.l.b16 %v590
  %v649 = vunpack.c.l.b16 %v591
  %v650 = vunpack.c.l.b16 %v592
  %v651 = vunpack.c.l.b16 %v593
  %v652 = vunpack.c.l.b16 %v594
  %v653 = vunpack.c.l.b16 %v595
  %v654 = vunpack.c.l.b16 %v596
  %v655 = vunpack.c.l.b16 %v597
  %v656 = vunpack.c.l.b16 %v598
  %v657 = vunpack.c.l.b16 %v599
  %v658 = vunpack.c.l.b16 %v600
  %v659 = vunpack.c.l.b16 %v601
  %v660 = vunpack.c.l.b16 %v602
  %v661 = vunpack.c.l.b16 %v603
  %v662 = vpack.c.b16 %v647, %v646
  %v663 = vpack.c.b16 %v649, %v648
  %v664 = vpack.c.b16 %v651, %v650
  %v665 = vpack.c.b16 %v653, %v652
  %v666 = vpack.c.b16 %v655, %v654
  %v667 = vpack.c.b16 %v657, %v656
  %v668 = vpack.c.b16 %v659, %v658
  %v669 = vpack.c.b16 %v661, %v660
  %678 = vmatprep.subr.bf16.mxu0 0
  %679 = vmatpush1.bf16.msra.mxu0 %v662
  %680 = vmatprep.subr.bf16.mxu0 0
  %681 = vmatpush1.bf16.msra.mxu0 %v663
  %682 = vmatprep.subr.bf16.mxu0 0
  %683 = vmatpush1.bf16.msra.mxu0 %v664
  %684 = vmatprep.subr.bf16.mxu0 0
  %685 = vmatpush1.bf16.msra.mxu0 %v665
  %686 = vmatprep.subr.bf16.mxu0 0
  %687 = vmatpush1.bf16.msra.mxu0 %v666
  %688 = vmatprep.subr.bf16.mxu0 0
  %689 = vmatpush1.bf16.msra.mxu0 %v667
  %690 = vmatprep.subr.bf16.mxu0 0
  %691 = vmatpush1.bf16.msra.mxu0 %v668
  %692 = vmatprep.subr.bf16.mxu0 0
  %693 = vmatpush1.bf16.msra.mxu0 %v669
  %694 = vmatprep.subr.bf16.mxu0 0
  %695 = vmatpush1.bf16.msra.mxu0 0
  %696 = vmatprep.subr.bf16.mxu0 0
  %697 = vmatpush1.bf16.msra.mxu0 0
  %698 = vmatprep.subr.bf16.mxu0 0
  %699 = vmatpush1.bf16.msra.mxu0 0
  %700 = vmatprep.subr.bf16.mxu0 0
  %701 = vmatpush1.bf16.msra.mxu0 0
  %702 = vmatprep.subr.bf16.mxu0 0
  %703 = vmatpush1.bf16.msra.mxu0 0
  %704 = vmatprep.subr.bf16.mxu0 0
  %705 = vmatpush1.bf16.msra.mxu0 0
  %706 = vmatprep.subr.bf16.mxu0 0
  %707 = vmatpush1.bf16.msra.mxu0 0
  %708 = vmatprep.subr.bf16.mxu0 0
  %709 = vmatpush1.bf16.msra.mxu0 0
  %710 = vmatprep.mubr.bf16.mxu0 0
  %711 = vmatmul.mubr.bf16.gmra.mrb[0].mxu0 %v615
  %v712 = vpop.f32.mrb[0].mxu0
  %v713 = vadd.f32 0.0, %v712
  %v714 = vpop.f32.mrb[0].mxu0
  %v715 = vpop.f32.mrb[0].mxu0
  %v716 = vadd.f32 0.0, %v715
  %v717 = vpop.f32.mrb[0].mxu0
  %718 = vmatprep.mubr.bf16.mxu0 0
  %719 = vmatmul.mubr.bf16.gmra.mrb[0].mxu0 %v623
  %v720 = vpop.f32.mrb[0].mxu0
  %v721 = vadd.f32 0.0, %v720
  %v722 = vpop.f32.mrb[0].mxu0
  %v723 = vpop.f32.mrb[0].mxu0
  %v724 = vadd.f32 0.0, %v723
  %v725 = vpop.f32.mrb[0].mxu0
  %726 = vmatprep.mubr.bf16.mxu0 0
  %727 = vmatmul.mubr.bf16.gmra.mrb[0].mxu0 %v626
  %v728 = vpop.f32.mrb[0].mxu0
  %v729 = vadd.f32 0.0, %v728
  %v730 = vpop.f32.mrb[0].mxu0
  %v731 = vpop.f32.mrb[0].mxu0
  %v732 = vpop.f32.mrb[0].mxu0
  %733 = vdwg.mxu0
  %v750 = vunpack.c.l.b16 %v571
  %v751 = vunpack.c.l.b16 %v572
  %v752 = vunpack.c.l.b16 %v573
  %v753 = vunpack.c.l.b16 %v574
  %v754 = vunpack.c.l.b16 %v575
  %v755 = vunpack.c.l.b16 %v576
  %v756 = vunpack.c.l.b16 %v577
  %v757 = vunpack.c.l.b16 %v578
  %v758 = vunpack.c.l.b16 %v579
  %v759 = vunpack.c.l.b16 %v580
  %v760 = vunpack.c.l.b16 %v581
  %v761 = vunpack.c.l.b16 %v582
  %v762 = vunpack.c.l.b16 %v583
  %v763 = vunpack.c.l.b16 %v584
  %v764 = vunpack.c.l.b16 %v585
  %v765 = vunpack.c.l.b16 %v586
  %v766 = vpack.c.b16 %v751, %v750
  %v767 = vpack.c.b16 %v753, %v752
  %v768 = vpack.c.b16 %v755, %v754
  %v769 = vpack.c.b16 %v757, %v756
  %v770 = vpack.c.b16 %v759, %v758
  %v771 = vpack.c.b16 %v761, %v760
  %v772 = vpack.c.b16 %v763, %v762
  %v773 = vpack.c.b16 %v765, %v764
  %782 = vmatprep.subr.bf16.mxu0 0
  %783 = vmatpush1.bf16.msra.mxu0 %v766
  %784 = vmatprep.subr.bf16.mxu0 0
  %785 = vmatpush1.bf16.msra.mxu0 %v767
  %786 = vmatprep.subr.bf16.mxu0 0
  %787 = vmatpush1.bf16.msra.mxu0 %v768
  %788 = vmatprep.subr.bf16.mxu0 0
  %789 = vmatpush1.bf16.msra.mxu0 %v769
  %790 = vmatprep.subr.bf16.mxu0 0
  %791 = vmatpush1.bf16.msra.mxu0 %v770
  %792 = vmatprep.subr.bf16.mxu0 0
  %793 = vmatpush1.bf16.msra.mxu0 %v771
  %794 = vmatprep.subr.bf16.mxu0 0
  %795 = vmatpush1.bf16.msra.mxu0 %v772
  %796 = vmatprep.subr.bf16.mxu0 0
  %797 = vmatpush1.bf16.msra.mxu0 %v773
  %798 = vmatprep.subr.bf16.mxu0 0
  %799 = vmatpush1.bf16.msra.mxu0 0
  %800 = vmatprep.subr.bf16.mxu0 0
  %801 = vmatpush1.bf16.msra.mxu0 0
  %802 = vmatprep.subr.bf16.mxu0 0
  %803 = vmatpush1.bf16.msra.mxu0 0
  %804 = vmatprep.subr.bf16.mxu0 0
  %805 = vmatpush1.bf16.msra.mxu0 0
  %806 = vmatprep.subr.bf16.mxu0 0
  %807 = vmatpush1.bf16.msra.mxu0 0
  %808 = vmatprep.subr.bf16.mxu0 0
  %809 = vmatpush1.bf16.msra.mxu0 0
  %810 = vmatprep.subr.bf16.mxu0 0
  %811 = vmatpush1.bf16.msra.mxu0 0
  %812 = vmatprep.subr.bf16.mxu0 0
  %813 = vmatpush1.bf16.msra.mxu0 0
  %814 = vmatprep.mubr.bf16.mxu0 0
  %815 = vmatmul.mubr.bf16.gmra.mrb[0].mxu0 %v568
  %v816 = vpop.f32.mrb[0].mxu0
  %v817 = vadd.f32 %v713, %v816
  %v818 = vpop.f32.mrb[0].mxu0
  %v819 = vpop.f32.mrb[0].mxu0
  %v820 = vadd.f32 %v716, %v819
  %v821 = vpop.f32.mrb[0].mxu0
  %822 = vmatprep.mubr.bf16.mxu0 0
  %823 = vmatmul.mubr.bf16.gmra.mrb[0].mxu0 %v569
  %v824 = vpop.f32.mrb[0].mxu0
  %v825 = vadd.f32 %v721, %v824
  %v826 = vpop.f32.mrb[0].mxu0
  %v827 = vpop.f32.mrb[0].mxu0
  %v828 = vadd.f32 %v724, %v827
  %v829 = vpop.f32.mrb[0].mxu0
  %830 = vmatprep.mubr.bf16.mxu0 0
  %831 = vmatmul.mubr.bf16.gmra.mrb[0].mxu0 %v570
  %v832 = vpop.f32.mrb[0].mxu0
  %v833 = vadd.f32 %v729, %v832
  %v834 = vpop.f32.mrb[0].mxu0
  %v835 = vpop.f32.mrb[0].mxu0
  %v836 = vpop.f32.mrb[0].mxu0
  %837 = vdwg.mxu0
  %s838 = scalar_lea.vmem %s2, 128
  %v839 = vld [vmem:[%s838] sm:$0xf]
  %v840 = vld [vmem:[%s838 + $0x4] sm:$0xf]
  %v841 = vld [vmem:[%s838 + $0x8] sm:$0xf]
  %v842 = vld [vmem:[%s838 + $0xc] sm:$0xf]
  %v843 = vld [vmem:[%s838 + $0x10] sm:$0xf]
  %v844 = vld [vmem:[%s838 + $0x14] sm:$0xf]
  %v845 = vld [vmem:[%s838 + $0x18] sm:$0xf]
  %v846 = vld [vmem:[%s838 + $0x1c] sm:$0xf]
  %v847 = vld [vmem:[%s838 + $0x20] sm:$0xf]
  %v848 = vld [vmem:[%s838 + $0x24] sm:$0xf]
  %v849 = vld [vmem:[%s838 + $0x28] sm:$0xf]
  %v850 = vld [vmem:[%s838 + $0x2c] sm:$0xf]
  %v851 = vld [vmem:[%s838 + $0x30] sm:$0xf]
  %v852 = vld [vmem:[%s838 + $0x34] sm:$0xf]
  %v853 = vld [vmem:[%s838 + $0x38] sm:$0xf]
  %v854 = vld [vmem:[%s838 + $0x3c] sm:$0xf]
  %v858 = vrot.slane %v568, 1
  %v859 = vrot.slane %v569, 1
  %v860 = vsel %vm298, %v858, %v859
  %v861 = vrot.slane %v570, 1
  %v862 = vsel %vm298, %v859, %v861
  %v882 = vunpack.c.l.b16 %v839
  %v883 = vunpack.c.l.b16 %v840
  %v884 = vunpack.c.l.b16 %v841
  %v885 = vunpack.c.l.b16 %v842
  %v886 = vunpack.c.l.b16 %v843
  %v887 = vunpack.c.l.b16 %v844
  %v888 = vunpack.c.l.b16 %v845
  %v889 = vunpack.c.l.b16 %v846
  %v890 = vunpack.c.l.b16 %v847
  %v891 = vunpack.c.l.b16 %v848
  %v892 = vunpack.c.l.b16 %v849
  %v893 = vunpack.c.l.b16 %v850
  %v894 = vunpack.c.l.b16 %v851
  %v895 = vunpack.c.l.b16 %v852
  %v896 = vunpack.c.l.b16 %v853
  %v897 = vunpack.c.l.b16 %v854
  %v898 = vpack.c.b16 %v883, %v882
  %v899 = vpack.c.b16 %v885, %v884
  %v900 = vpack.c.b16 %v887, %v886
  %v901 = vpack.c.b16 %v889, %v888
  %v902 = vpack.c.b16 %v891, %v890
  %v903 = vpack.c.b16 %v893, %v892
  %v904 = vpack.c.b16 %v895, %v894
  %v905 = vpack.c.b16 %v897, %v896
  %914 = vmatprep.subr.bf16.mxu0 0
  %915 = vmatpush1.bf16.msra.mxu0 %v898
  %916 = vmatprep.subr.bf16.mxu0 0
  %917 = vmatpush1.bf16.msra.mxu0 %v899
  %918 = vmatprep.subr.bf16.mxu0 0
  %919 = vmatpush1.bf16.msra.mxu0 %v900
  %920 = vmatprep.subr.bf16.mxu0 0
  %921 = vmatpush1.bf16.msra.mxu0 %v901
  %922 = vmatprep.subr.bf16.mxu0 0
  %923 = vmatpush1.bf16.msra.mxu0 %v902
  %924 = vmatprep.subr.bf16.mxu0 0
  %925 = vmatpush1.bf16.msra.mxu0 %v903
  %926 = vmatprep.subr.bf16.mxu0 0
  %927 = vmatpush1.bf16.msra.mxu0 %v904
  %928 = vmatprep.subr.bf16.mxu0 0
  %929 = vmatpush1.bf16.msra.mxu0 %v905
  %930 = vmatprep.subr.bf16.mxu0 0
  %931 = vmatpush1.bf16.msra.mxu0 0
  %932 = vmatprep.subr.bf16.mxu0 0
  %933 = vmatpush1.bf16.msra.mxu0 0
  %934 = vmatprep.subr.bf16.mxu0 0
  %935 = vmatpush1.bf16.msra.mxu0 0
  %936 = vmatprep.subr.bf16.mxu0 0
  %937 = vmatpush1.bf16.msra.mxu0 0
  %938 = vmatprep.subr.bf16.mxu0 0
  %939 = vmatpush1.bf16.msra.mxu0 0
  %940 = vmatprep.subr.bf16.mxu0 0
  %941 = vmatpush1.bf16.msra.mxu0 0
  %942 = vmatprep.subr.bf16.mxu0 0
  %943 = vmatpush1.bf16.msra.mxu0 0
  %944 = vmatprep.subr.bf16.mxu0 0
  %945 = vmatpush1.bf16.msra.mxu0 0
  %946 = vmatprep.mubr.bf16.mxu0 0
  %947 = vmatmul.mubr.bf16.gmra.mrb[0].mxu0 %v860
  %v948 = vpop.f32.mrb[0].mxu0
  %v949 = vadd.f32 0.0, %v948
  %v950 = vpop.f32.mrb[0].mxu0
  %v951 = vpop.f32.mrb[0].mxu0
  %v952 = vadd.f32 0.0, %v951
  %v953 = vpop.f32.mrb[0].mxu0
  %954 = vmatprep.mubr.bf16.mxu0 0
  %955 = vmatmul.mubr.bf16.gmra.mrb[0].mxu0 %v862
  %v956 = vpop.f32.mrb[0].mxu0
  %v957 = vadd.f32 0.0, %v956
  %v958 = vpop.f32.mrb[0].mxu0
  %v959 = vpop.f32.mrb[0].mxu0
  %v960 = vadd.f32 0.0, %v959
  %v961 = vpop.f32.mrb[0].mxu0
  %962 = vmatprep.mubr.bf16.mxu0 0
  %963 = vmatmul.mubr.bf16.gmra.mrb[0].mxu0 %v861
  %v964 = vpop.f32.mrb[0].mxu0
  %v965 = vadd.f32 0.0, %v964
  %v966 = vpop.f32.mrb[0].mxu0
  %v967 = vpop.f32.mrb[0].mxu0
  %v968 = vpop.f32.mrb[0].mxu0
  %969 = vdwg.mxu0
  %v970 = vadd.f32 %v817, %v949
  %v971 = vadd.f32 %v820, %v952
  %v972 = vadd.f32 %v825, %v957
  %v973 = vadd.f32 %v828, %v960
  %v974 = vadd.f32 %v833, %v965
  %v975 = vlaneseq
  %v976 = vshrl.u32 %v975, 7
  %v977 = vsub.s32 1, %v976
  %v978 = vrot.slane %v23, %v977
  %v979 = vadd.f32 %v970, %v978
  %v980 = vadd.f32 %v971, %v978
  %v981 = vadd.f32 %v972, %v978
  %v982 = vadd.f32 %v973, %v978
  %v983 = vadd.f32 %v974, %v978
  %v984 = vmul.f32 %v979, 0.2
  %v985 = vmul.f32 %v980, 0.2
  %v986 = vmul.f32 %v981, 0.2
  %v987 = vmul.f32 %v982, 0.2
  %v988 = vmul.f32 %v983, 0.2
  %v989 = vmax.f32 %v979, %v984
  %v990 = vmax.f32 %v980, %v985
  %v991 = vmax.f32 %v981, %v986
  %v992 = vmax.f32 %v982, %v987
  %v993 = vmax.f32 %v983, %v988
  %vm999 = vcmask 1046528
  %v1000 = vrot.slane %v447, 1
  %v1001 = vrot.slane %v448, 1
  %v1002 = vsel %vm999, %v1000, %v1001
  %v1003 = vrot.slane %v449, 1
  %v1004 = vsel %vm999, %v1001, %v1003
  %v1005 = vrot.slane %v450, 1
  %v1006 = vsel %vm999, %v1003, %v1005
  %v1007 = vrot.slane %v451, 1
  %v1008 = vsel %vm999, %v1005, %v1007
  %v1014 = vadd.f32 %v989, %v1002
  %v1015 = vadd.f32 %v990, %v1004
  %v1016 = vadd.f32 %v991, %v1006
  %v1017 = vadd.f32 %v992, %v1008
  %v1018 = vadd.f32 %v993, %v1007
  %1019 = vst [vmem:[%s4] sm:$0xff] %v1014
  %1020 = vst [vmem:[%s4 + $0x8] sm:$0xff] %v1015
  %1021 = vst [vmem:[%s4 + $0x10] sm:$0xff] %v1016
  %1022 = vst [vmem:[%s4 + $0x18] sm:$0xff] %v1017
  %1023 = vst [vmem:[%s4 + $0x20] sm:$0xf] %v1018
  // Predicated region
  $region18: #{subspace_forward.1} parent=0 // pred_check
    _
  $region19: #{subspace_forward.1} parent=0 // pred_check_branch
    %1025 = sbr.rel (0) target = $region21
  $region20: #{subspace_forward.1} parent=0 // pred_region
    _
  $region21: #{subspace_forward.1} parent=0 // pred_fallthru
    _
  // Predicated region
  $region22: #{subspace_forward.1} parent=0 // pred_check
    _
  $region23: #{subspace_forward.1} parent=0 // pred_check_branch
    %1027 = sbr.rel (0) target = $region25
  $region24: #{subspace_forward.1} parent=0 // pred_region
    _
  $region25: #{subspace_forward.1} parent=0 // pred_fallthru
    _

</llo_original>
